<compile_context>
chip_gen: v7x
topology: tpu7x:2x2x1
jax: 0.10.0
libtpu: 0.0.40
codegen_flags: <defaults>
</compile_context>

<pallas_src>
import functools

import jax
import jax.numpy as jnp
from jax import lax
from jax.experimental import pallas as pl
from jax.experimental.pallas import tpu as pltpu

LANE = 128


def _round_up(n, m=LANE):
    return ((n + m - 1) // m) * m


# ----------------------------------------------------------------------------
# Pallas kernels
# ----------------------------------------------------------------------------
def _temporal_block_kernel(*refs, K, dilation, has_down):
    """Fused TemporalBlock: relu(conv2(relu(conv1(x))) + residual(x)).

    refs per grid step b:
      x_ref : (1, T, Cin_p)       bf16 activation
      w1    : (K*Cin_p, Cout_p)   bf16 im2col weights (tap-major rows)
      b1    : (1, Cout_p)         f32
      w2    : (K*Cout_p, Cout_p)  bf16
      b2    : (1, Cout_p)         f32
      [wd   : (Cin_p, Cout_p)     bf16 1x1 residual downsample]
      [bd   : (1, Cout_p)         f32]
      o_ref : (1, T, Cout_p)      bf16
    """
    if has_down:
        x_ref, w1_ref, b1_ref, w2_ref, b2_ref, wd_ref, bd_ref, o_ref = refs
    else:
        x_ref, w1_ref, b1_ref, w2_ref, b2_ref, o_ref = refs

    x = x_ref[0]                                     # (T, Cin_p) bf16
    x_f32 = x.astype(jnp.float32)

    def causal_conv(inp_f32, w_ref, b_ref):
        # im2col: K causally-shifted copies concatenated along lanes, then one
        # MXU matmul with f32 accumulation.
        T_, C_ = inp_f32.shape
        t_idx = lax.broadcasted_iota(jnp.int32, (T_, C_), 0)
        cols = []
        for k in range(K):                           # static unroll over taps
            shift = (K - 1 - k) * dilation
            if shift == 0:
                xs = inp_f32
            else:
                xs = pltpu.roll(inp_f32, shift=shift, axis=0)   # XLU rotate
                xs = jnp.where(t_idx >= shift, xs, 0.0)         # causal mask
            cols.append(xs)
        xcat = jnp.concatenate(cols, axis=-1)        # (T, K*C) f32
        acc = jnp.dot(xcat.astype(jnp.bfloat16), w_ref[...],
                      preferred_element_type=jnp.float32)
        return jnp.maximum(acc + b_ref[...], 0.0)    # bias + relu in f32

    h1 = causal_conv(x_f32, w1_ref, b1_ref)          # conv1 + chomp + relu
    h2 = causal_conv(h1, w2_ref, b2_ref)             # conv2 + chomp + relu

    if has_down:                                     # 1x1 conv on residual path
        res = jnp.dot(x, wd_ref[...],
                      preferred_element_type=jnp.float32) + bd_ref[...]
    else:
        res = x_f32
    o_ref[0] = jnp.maximum(h2 + res, 0.0).astype(o_ref.dtype)


def _linear_head_kernel(h_ref, w_ref, b_ref, o_ref, *, L):
    """Final nn.Linear over the last L timesteps: h[:, -L:, :] @ W + b."""
    T = h_ref.shape[1]
    h = h_ref[0]                                     # (T, C_p) bf16
    h = h[T - L:, :]                                 # (L, C_p) static slice
    acc = jnp.dot(h, w_ref[...], preferred_element_type=jnp.float32)
    o_ref[0] = (acc + b_ref[...]).astype(o_ref.dtype)


# ----------------------------------------------------------------------------
# Wrappers around pallas_call
# ----------------------------------------------------------------------------
def temporal_block(x, blk, *, K):
    B, T, cin_p = x.shape
    cout_p = blk["b1"].shape[-1]
    has_down = "wd" in blk
    kernel = functools.partial(_temporal_block_kernel, K=K,
                               dilation=blk["dilation"], has_down=has_down)
    in_specs = [
        pl.BlockSpec((1, T, cin_p), lambda i: (i, 0, 0)),
        pl.BlockSpec((K * cin_p, cout_p), lambda i: (0, 0)),
        pl.BlockSpec((1, cout_p), lambda i: (0, 0)),
        pl.BlockSpec((K * cout_p, cout_p), lambda i: (0, 0)),
        pl.BlockSpec((1, cout_p), lambda i: (0, 0)),
    ]
    args = [x, blk["w1"], blk["b1"], blk["w2"], blk["b2"]]
    if has_down:
        in_specs += [pl.BlockSpec((cin_p, cout_p), lambda i: (0, 0)),
                     pl.BlockSpec((1, cout_p), lambda i: (0, 0))]
        args += [blk["wd"], blk["bd"]]
    return pl.pallas_call(
        kernel,
        out_shape=jax.ShapeDtypeStruct((B, T, cout_p), jnp.bfloat16),
        grid=(B,),
        in_specs=in_specs,
        out_specs=pl.BlockSpec((1, T, cout_p), lambda i: (i, 0, 0)),
        compiler_params=pltpu.CompilerParams(dimension_semantics=("parallel",)),
    )(*args)


def linear_head(h, w, b, *, L):
    B, T, c_p = h.shape
    o_p = w.shape[-1]
    return pl.pallas_call(
        functools.partial(_linear_head_kernel, L=L),
        out_shape=jax.ShapeDtypeStruct((B, L, o_p), jnp.float32),
        grid=(B,),
        in_specs=[
            pl.BlockSpec((1, T, c_p), lambda i: (i, 0, 0)),
            pl.BlockSpec((c_p, o_p), lambda i: (0, 0)),
            pl.BlockSpec((1, o_p), lambda i: (0, 0)),
        ],
        out_specs=pl.BlockSpec((1, L, o_p), lambda i: (i, 0, 0)),
        compiler_params=pltpu.CompilerParams(dimension_semantics=("parallel",)),
    )(h, w, b)


# ----------------------------------------------------------------------------
# Parameter construction (deterministic, mirrors TCN.__init__ shapes)
# ----------------------------------------------------------------------------
def init_tcn_params(key, input_size, output_channels, num_channels, kernel_size):
    params = {"blocks": [], "out_channels": output_channels,
              "cin0_p": _round_up(input_size)}
    cin = input_size
    for i, cout in enumerate(num_channels):
        cin_p, cout_p = _round_up(cin), _round_up(cout)
        key, k1, k2, k3, k4, k5, k6 = jax.random.split(key, 7)

        def conv_w(k, kin, kin_p):
            # torch Conv1d weight (Cout, Cin, K) -> tap-major (K, Cin, Cout),
            # zero-padded to (K, Cin_p, Cout_p), im2col-reshaped (K*Cin_p, Cout_p).
            w = 0.01 * jax.random.normal(k, (kernel_size, kin, cout), jnp.float32)
            wp = jnp.zeros((kernel_size, kin_p, cout_p), jnp.float32)
            wp = wp.at[:, :kin, :cout].set(w)
            return wp.reshape(kernel_size * kin_p, cout_p).astype(jnp.bfloat16)

        def bias(k):
            b = 0.01 * jax.random.normal(k, (cout,), jnp.float32)
            return jnp.zeros((1, cout_p), jnp.float32).at[0, :cout].set(b)

        blk = {"w1": conv_w(k1, cin, cin_p), "b1": bias(k2),
               "w2": conv_w(k3, cout, cout_p), "b2": bias(k4),
               "dilation": 2 ** i}
        if cin != cout:  # 1x1 downsample conv on the residual path
            wd = 0.01 * jax.random.normal(k5, (cin, cout), jnp.float32)
            blk["wd"] = (jnp.zeros((cin_p, cout_p), jnp.float32)
                         .at[:cin, :cout].set(wd).astype(jnp.bfloat16))
            blk["bd"] = bias(k6)
        params["blocks"].append(blk)
        cin = cout

    key, k1, k2 = jax.random.split(key, 3)
    c = num_channels[-1]
    c_p, o_p = _round_up(c), _round_up(output_channels)
    # nn.Linear(num_channels[-1], output_channels): weight (O, C) -> (C_p, O_p)
    w = 0.01 * jax.random.normal(k1, (output_channels, c), jnp.float32)
    params["w_lin"] = (jnp.zeros((c_p, o_p), jnp.float32)
                       .at[:c, :output_channels].set(w.T).astype(jnp.bfloat16))
    b = 0.01 * jax.random.normal(k2, (output_channels,), jnp.float32)
    params["b_lin"] = (jnp.zeros((1, o_p), jnp.float32)
                       .at[0, :output_channels].set(b))
    return params


# ----------------------------------------------------------------------------
# Forward pass
# ----------------------------------------------------------------------------
def tcn_forward(params, x, *, kernel_size, output_length):
    """x: (B, T) float32  ->  (B, output_length, output_channels) float32."""
    B, T = x.shape
    # x.unsqueeze(1) in NCW == channels-last (B, T, 1); zero-pad to 128 lanes.
    h = jnp.zeros((B, T, params["cin0_p"]), jnp.bfloat16)
    h = h.at[:, :, 0].set(x.astype(jnp.bfloat16))
    for blk in params["blocks"]:
        h = temporal_block(h, blk, K=kernel_size)
    out_p = linear_head(h, params["w_lin"], params["b_lin"], L=output_length)
    return out_p[:, :, :params["out_channels"]]


# ----------------------------------------------------------------------------
if __name__ == "__main__":
    # Small config consistent with the copy-memory TCN: input_size=1 (scalar
    # sequence), a stack of TemporalBlocks, linear head to output_channels.
    B, T = 2, 16
    input_size = 1
    num_channels = [8, 8]
    kernel_size = 3
    output_channels = 10
    output_length = 8

    key = jax.random.PRNGKey(0)
    key, kx, kp = jax.random.split(key, 3)
    x = jax.random.normal(kx, (B, T), jnp.float32)

    params = init_tcn_params(kp, input_size, output_channels,
                             num_channels, kernel_size)

    out = tcn_forward(params, x, kernel_size=kernel_size,
                      output_length=output_length)
    out = jax.block_until_ready(out)
    assert out.shape == (B, output_length, output_channels), out.shape
    print("KERNEL_OK")
</pallas_src>

<mosaic_0001>
module attributes {stable_mosaic.version = 11 : i64} {
  func.func @_temporal_block_kernel(%arg0: i32, %arg1: memref<1x16x128xbf16, #tpu.memory_space<vmem>>, %arg2: memref<384x128xbf16, #tpu.memory_space<vmem>>, %arg3: memref<1x128xf32, #tpu.memory_space<vmem>>, %arg4: memref<384x128xbf16, #tpu.memory_space<vmem>>, %arg5: memref<1x128xf32, #tpu.memory_space<vmem>>, %arg6: memref<128x128xbf16, #tpu.memory_space<vmem>>, %arg7: memref<1x128xf32, #tpu.memory_space<vmem>>, %arg8: memref<1x16x128xbf16, #tpu.memory_space<vmem>>) attributes {dimension_semantics = [#tpu.dimension_semantics<parallel>], iteration_bounds = array<i64: 2>, scalar_prefetch = 0 : i64, scratch_operands = 0 : i64, tpu.core_type = #tpu.core_type<tc>, window_params = [{transform_indices = @transform_0, window_bounds = array<i64: 1, 16, 128>}, {pipeline_mode = #tpu.pipeline_mode<synchronous>, transform_indices = @transform_1, window_bounds = array<i64: 384, 128>}, {pipeline_mode = #tpu.pipeline_mode<synchronous>, transform_indices = @transform_2, window_bounds = array<i64: 1, 128>}, {pipeline_mode = #tpu.pipeline_mode<synchronous>, transform_indices = @transform_3, window_bounds = array<i64: 384, 128>}, {pipeline_mode = #tpu.pipeline_mode<synchronous>, transform_indices = @transform_4, window_bounds = array<i64: 1, 128>}, {pipeline_mode = #tpu.pipeline_mode<synchronous>, transform_indices = @transform_5, window_bounds = array<i64: 128, 128>}, {pipeline_mode = #tpu.pipeline_mode<synchronous>, transform_indices = @transform_6, window_bounds = array<i64: 1, 128>}, {transform_indices = @transform_7, window_bounds = array<i64: 1, 16, 128>}]} {
    %c0 = arith.constant 0 : index
    %c0_0 = arith.constant 0 : index
    %c0_1 = arith.constant 0 : index
    %0 = vector.load %arg1[%c0, %c0_0, %c0_1] : memref<1x16x128xbf16, #tpu.memory_space<vmem>>, vector<1x16x128xbf16>
    %1 = vector.shape_cast %0 : vector<1x16x128xbf16> to vector<16x128xbf16>
    %2 = arith.extf %1 : vector<16x128xbf16> to vector<16x128xf32>
    %3 = tpu.iota {dimensions = array<i32: 0>} : vector<16x128xi32>
    %c2_i32 = arith.constant 2 : i32
    %4 = tpu.dynamic_rotate %2 by %c2_i32 dim 0 : vector<16x128xf32>, i32 -> vector<16x128xf32>
    %c2_i32_2 = arith.constant 2 : i32
    %5 = vector.broadcast %c2_i32_2 : i32 to vector<16x128xi32>
    %6 = arith.cmpi sge, %3, %5 : vector<16x128xi32>
    %cst = arith.constant 0.000000e+00 : f32
    %7 = vector.broadcast %cst : f32 to vector<16x128xf32>
    %8 = arith.select %6, %4, %7 : vector<16x128xi1>, vector<16x128xf32>
    %c1_i32 = arith.constant 1 : i32
    %9 = tpu.dynamic_rotate %2 by %c1_i32 dim 0 : vector<16x128xf32>, i32 -> vector<16x128xf32>
    %c1_i32_3 = arith.constant 1 : i32
    %10 = vector.broadcast %c1_i32_3 : i32 to vector<16x128xi32>
    %11 = arith.cmpi sge, %3, %10 : vector<16x128xi32>
    %cst_4 = arith.constant 0.000000e+00 : f32
    %12 = vector.broadcast %cst_4 : f32 to vector<16x128xf32>
    %13 = arith.select %11, %9, %12 : vector<16x128xi1>, vector<16x128xf32>
    %14 = tpu.concatenate %8, %13, %2 in 1 : vector<16x128xf32>, vector<16x128xf32>, vector<16x128xf32> -> vector<16x384xf32>
    %15 = arith.truncf %14 : vector<16x384xf32> to vector<16x384xbf16>
    %c0_5 = arith.constant 0 : index
    %c0_6 = arith.constant 0 : index
    %16 = vector.load %arg2[%c0_5, %c0_6] : memref<384x128xbf16, #tpu.memory_space<vmem>>, vector<384x128xbf16>
    %cst_7 = arith.constant dense<0.000000e+00> : vector<16x128xf32>
    %17 = tpu.matmul %15, %16, %cst_7 {dimension_numbers = #tpu.dot_dimension_numbers<[1], [0], [0], [1], [0, 0, 1, 1], [], []>} : vector<16x384xbf16>, vector<384x128xbf16>, vector<16x128xf32> -> vector<16x128xf32>
    %c0_8 = arith.constant 0 : index
    %c0_9 = arith.constant 0 : index
    %18 = vector.load %arg3[%c0_8, %c0_9] : memref<1x128xf32, #tpu.memory_space<vmem>>, vector<1x128xf32>
    %19 = vector.broadcast %18 : vector<1x128xf32> to vector<16x128xf32>
    %20 = arith.addf %17, %19 : vector<16x128xf32>
    %cst_10 = arith.constant 0.000000e+00 : f32
    %21 = vector.broadcast %cst_10 : f32 to vector<16x128xf32>
    %22 = arith.maximumf %20, %21 : vector<16x128xf32>
    %23 = tpu.iota {dimensions = array<i32: 0>} : vector<16x128xi32>
    %c2_i32_11 = arith.constant 2 : i32
    %24 = tpu.dynamic_rotate %22 by %c2_i32_11 dim 0 : vector<16x128xf32>, i32 -> vector<16x128xf32>
    %c2_i32_12 = arith.constant 2 : i32
    %25 = vector.broadcast %c2_i32_12 : i32 to vector<16x128xi32>
    %26 = arith.cmpi sge, %23, %25 : vector<16x128xi32>
    %cst_13 = arith.constant 0.000000e+00 : f32
    %27 = vector.broadcast %cst_13 : f32 to vector<16x128xf32>
    %28 = arith.select %26, %24, %27 : vector<16x128xi1>, vector<16x128xf32>
    %c1_i32_14 = arith.constant 1 : i32
    %29 = tpu.dynamic_rotate %22 by %c1_i32_14 dim 0 : vector<16x128xf32>, i32 -> vector<16x128xf32>
    %c1_i32_15 = arith.constant 1 : i32
    %30 = vector.broadcast %c1_i32_15 : i32 to vector<16x128xi32>
    %31 = arith.cmpi sge, %23, %30 : vector<16x128xi32>
    %cst_16 = arith.constant 0.000000e+00 : f32
    %32 = vector.broadcast %cst_16 : f32 to vector<16x128xf32>
    %33 = arith.select %31, %29, %32 : vector<16x128xi1>, vector<16x128xf32>
    %34 = tpu.concatenate %28, %33, %22 in 1 : vector<16x128xf32>, vector<16x128xf32>, vector<16x128xf32> -> vector<16x384xf32>
    %35 = arith.truncf %34 : vector<16x384xf32> to vector<16x384xbf16>
    %c0_17 = arith.constant 0 : index
    %c0_18 = arith.constant 0 : index
    %36 = vector.load %arg4[%c0_17, %c0_18] : memref<384x128xbf16, #tpu.memory_space<vmem>>, vector<384x128xbf16>
    %cst_19 = arith.constant dense<0.000000e+00> : vector<16x128xf32>
    %37 = tpu.matmul %35, %36, %cst_19 {dimension_numbers = #tpu.dot_dimension_numbers<[1], [0], [0], [1], [0, 0, 1, 1], [], []>} : vector<16x384xbf16>, vector<384x128xbf16>, vector<16x128xf32> -> vector<16x128xf32>
    %c0_20 = arith.constant 0 : index
    %c0_21 = arith.constant 0 : index
    %38 = vector.load %arg5[%c0_20, %c0_21] : memref<1x128xf32, #tpu.memory_space<vmem>>, vector<1x128xf32>
    %39 = vector.broadcast %38 : vector<1x128xf32> to vector<16x128xf32>
    %40 = arith.addf %37, %39 : vector<16x128xf32>
    %cst_22 = arith.constant 0.000000e+00 : f32
    %41 = vector.broadcast %cst_22 : f32 to vector<16x128xf32>
    %42 = arith.maximumf %40, %41 : vector<16x128xf32>
    %c0_23 = arith.constant 0 : index
    %c0_24 = arith.constant 0 : index
    %43 = vector.load %arg6[%c0_23, %c0_24] : memref<128x128xbf16, #tpu.memory_space<vmem>>, vector<128x128xbf16>
    %cst_25 = arith.constant dense<0.000000e+00> : vector<16x128xf32>
    %44 = tpu.matmul %1, %43, %cst_25 {dimension_numbers = #tpu.dot_dimension_numbers<[1], [0], [0], [1], [0, 0, 1, 1], [], []>} : vector<16x128xbf16>, vector<128x128xbf16>, vector<16x128xf32> -> vector<16x128xf32>
    %c0_26 = arith.constant 0 : index
    %c0_27 = arith.constant 0 : index
    %45 = vector.load %arg7[%c0_26, %c0_27] : memref<1x128xf32, #tpu.memory_space<vmem>>, vector<1x128xf32>
    %46 = vector.broadcast %45 : vector<1x128xf32> to vector<16x128xf32>
    %47 = arith.addf %44, %46 : vector<16x128xf32>
    %48 = arith.addf %42, %47 : vector<16x128xf32>
    %cst_28 = arith.constant 0.000000e+00 : f32
    %49 = vector.broadcast %cst_28 : f32 to vector<16x128xf32>
    %50 = arith.maximumf %48, %49 : vector<16x128xf32>
    %51 = arith.truncf %50 : vector<16x128xf32> to vector<16x128xbf16>
    %c0_29 = arith.constant 0 : index
    %c0_30 = arith.constant 0 : index
    %c0_31 = arith.constant 0 : index
    %52 = vector.load %arg8[%c0_29, %c0_30, %c0_31] : memref<1x16x128xbf16, #tpu.memory_space<vmem>>, vector<1x16x128xbf16>
    %53 = vector.shape_cast %52 : vector<1x16x128xbf16> to vector<16x128xbf16>
    %54 = vector.shape_cast %51 : vector<16x128xbf16> to vector<1x16x128xbf16>
    tpu.vector_store %arg8[%c0_29, %c0_30, %c0_31], %54 {strides = array<i32>} : memref<1x16x128xbf16, #tpu.memory_space<vmem>>, vector<1x16x128xbf16>,
    return
  }
  func.func @transform_0(%arg0: i32) -> (i32, i32, i32) {
    %c0_i32 = arith.constant 0 : i32
    %c0_i32_0 = arith.constant 0 : i32
    %c0_i32_1 = arith.constant 0 : i32
    return %arg0, %c0_i32, %c0_i32_0 : i32, i32, i32
  }
  func.func @transform_1(%arg0: i32) -> (i32, i32) {
    %c0_i32 = arith.constant 0 : i32
    %c0_i32_0 = arith.constant 0 : i32
    %c0_i32_1 = arith.constant 0 : i32
    return %c0_i32, %c0_i32_0 : i32, i32
  }
  func.func @transform_2(%arg0: i32) -> (i32, i32) {
    %c0_i32 = arith.constant 0 : i32
    %c0_i32_0 = arith.constant 0 : i32
    %c0_i32_1 = arith.constant 0 : i32
    return %c0_i32, %c0_i32_0 : i32, i32
  }
  func.func @transform_3(%arg0: i32) -> (i32, i32) {
    %c0_i32 = arith.constant 0 : i32
    %c0_i32_0 = arith.constant 0 : i32
    %c0_i32_1 = arith.constant 0 : i32
    return %c0_i32, %c0_i32_0 : i32, i32
  }
  func.func @transform_4(%arg0: i32) -> (i32, i32) {
    %c0_i32 = arith.constant 0 : i32
    %c0_i32_0 = arith.constant 0 : i32
    %c0_i32_1 = arith.constant 0 : i32
    return %c0_i32, %c0_i32_0 : i32, i32
  }
  func.func @transform_5(%arg0: i32) -> (i32, i32) {
    %c0_i32 = arith.constant 0 : i32
    %c0_i32_0 = arith.constant 0 : i32
    %c0_i32_1 = arith.constant 0 : i32
    return %c0_i32, %c0_i32_0 : i32, i32
  }
  func.func @transform_6(%arg0: i32) -> (i32, i32) {
    %c0_i32 = arith.constant 0 : i32
    %c0_i32_0 = arith.constant 0 : i32
    %c0_i32_1 = arith.constant 0 : i32
    return %c0_i32, %c0_i32_0 : i32, i32
  }
  func.func @transform_7(%arg0: i32) -> (i32, i32, i32) {
    %c0_i32 = arith.constant 0 : i32
    %c0_i32_0 = arith.constant 0 : i32
    %c0_i32_1 = arith.constant 0 : i32
    return %arg0, %c0_i32, %c0_i32_0 : i32, i32, i32
  }
}

</mosaic_0001>

<llo_original>
// kernel: tpu_custom_call.1
$region0: #{tpu_custom_call.1}
  #allocation0 [shape = 'u32[]', space=smem, size = 0x4, offset = 0x4, fixed_abs, tag = 'smem constant byte address 0x4 - core index']
  #allocation1 [shape = 'u32[144,128]{1,0:T(1,128)}', space=vmem, size = 0x12000, scoped, tag = 'internal scratch']
  %s0 = inlined_call_operand.hbm [shape: bf16[2,16,128], index: 0, kind: input, shape index: {}]
  %s1 = inlined_call_operand.hbm [shape: bf16[384,128], index: 1, kind: input, shape index: {}]
  %s2 = inlined_call_operand.vmem [shape: f32[1,128], index: 2, kind: input, shape index: {}]
  %s3 = inlined_call_operand.hbm [shape: bf16[384,128], index: 3, kind: input, shape index: {}]
  %s4 = inlined_call_operand.vmem [shape: f32[1,128], index: 4, kind: input, shape index: {}]
  %s5 = inlined_call_operand.hbm [shape: bf16[128,128], index: 5, kind: input, shape index: {}]
  %s6 = inlined_call_operand.vmem [shape: f32[1,128], index: 6, kind: input, shape index: {}]
  %s7 = inlined_call_operand.hbm [shape: bf16[2,16,128], index: 7, kind: output, shape index: {}]
  %s8 = sld [smem:[#allocation0]]
  $region77: #{tpu_custom_call.1} parent=0
    _
  %s10 = ssub.s32 1, %s8
  %s11 = scalar_select 0, %s10, %s8
  $region1: #{tpu_custom_call.1} parent=0
    #allocation2 [shape = 'u8[8192]{0}', space=vmem, size = 0x2000, scoped, tag = 'input window, operand 0']
    #allocation3 [shape = 's32[2]{0}', space=sflag, size = 0x8, scoped, tag = 'scoped memory for tpu_custom_call.1']
    #allocation4 [shape = 's32[2]{0}', space=sflag, size = 0x8, scoped, tag = 'scoped memory for tpu_custom_call.1']
    #allocation5 [shape = 'u8[98304]{0}', space=vmem, size = 0x18000, scoped, tag = 'input window, operand 1, single buffered']
    #allocation6 [shape = 's32[1]{0}', space=sflag, size = 0x4, scoped, tag = 'scoped memory for tpu_custom_call.1']
    #allocation7 [shape = 'u8[98304]{0}', space=vmem, size = 0x18000, scoped, tag = 'input window, operand 3, single buffered']
    #allocation8 [shape = 'u8[32768]{0}', space=vmem, size = 0x8000, scoped, tag = 'input window, operand 5, single buffered']
    #allocation9 [shape = 's32[1]{0}', space=sflag, size = 0x4, scoped, tag = 'scoped memory for tpu_custom_call.1']
    #allocation10 [shape = 'u8[8192]{0}', space=vmem, size = 0x2000, scoped, tag = 'output window, operand 0']
    %12 = vsyncpa [#allocation3], 0
    %s13 = scalar_lea.sflag [#allocation3], 1
    %14 = vsyncpa %s13, 0
    %15 = vsyncpa [#allocation6], 0
    %16 = vsyncpa [#allocation9], 0
    %17 = vsyncpa [#allocation4], 0
    %s18 = scalar_lea.sflag [#allocation4], 1
    %19 = vsyncpa %s18, 0
    loop: start=0, step=1, limit=4
    $region2: #{tpu_custom_call.1} parent=1 // loop_pre_header
      _
    $region3: #{tpu_custom_call.1} parent=1 // loop_header
      %s21 = sphi 0, %s25
      %p22 = scmp.ge.s32.totalorder %s21, 4
      %s31 = sphi 0, %s33
      %s34 = sphi 0, %s31
      %s35 = sphi 0, %s34
      %s51 = sphi 0, %s35
      %s55 = sphi 0, %s55
      %s57 = sphi 0, %s55
      %s58 = sphi 0, %s57
      %s72 = sphi 0, %s58
      %s76 = sphi 0, %s76
      %s78 = sphi 0, %s76
      %s79 = sphi 0, %s78
      %s93 = sphi 0, %s79
      %s97 = sphi 0, %s97
      %s99 = sphi 0, %s97
      %s100 = sphi 0, %s99
      %s114 = sphi 0, %s100
      %s118 = sphi 0, %s118
      %s120 = sphi 0, %s118
      %s121 = sphi 0, %s120
      %s135 = sphi 0, %s121
      %s139 = sphi 0, %s139
      %s141 = sphi 0, %s139
      %s142 = sphi 0, %s141
      %s156 = sphi 0, %s142
      %s160 = sphi 0, %s160
      %s162 = sphi 0, %s160
      %s163 = sphi 0, %s162
      %s177 = sphi 0, %s163
      %s183 = sphi 0, %s185
      %s186 = sphi 0, %s183
      %s187 = sphi 0, %s186
      %s203 = sphi 0, %s187
    $region4: #{tpu_custom_call.1} parent=1 // loop_header_branch
      %24 = sbr.rel (%p22) target = $region8
    $region5: #{tpu_custom_call.1} parent=1 // loop_body
      %s26 = ssub.s32 %s21, 1
      %s27 = ssub.s32 %s21, 2
      %s28 = sadd.s32 %s21, 1
      %s29 = ssub.s32 %s21, %s28
      %p30 = scmp.eq.s32.totalorder %s29, 0
      %s32 = sadd.s32 %s31, 1
      %s33 = scalar_select %p30, %s31, %s32
      %p36 = pneg %p30
      %p37 = scmp.eq.s32.totalorder %s21, 1
      %p38 = por %p36, %p37
      %p39 = scmp.ne.s32.totalorder %s31, %s34
      %p40 = scmp.eq.s32.totalorder %s21, 0
      %p41 = por %p39, %p40
      %p42 = scmp.ne.s32.totalorder %s31, %s34
      %p43 = scmp.eq.s32.totalorder %s26, 1
      %p44 = por %p42, %p43
      %p45 = scmp.ne.s32.totalorder %s34, %s35
      %p46 = scmp.eq.s32.totalorder %s26, 0
      %p47 = por %p45, %p46
      %p48 = scmp.ne.s32.totalorder %s34, %s35
      %p49 = scmp.eq.s32.totalorder %s27, 1
      %p50 = por %p48, %p49
      %p52 = scmp.ne.s32.totalorder %s35, %s51
      %p53 = scmp.eq.s32.totalorder %s27, 0
      %p54 = por %p52, %p53
      %s56 = sadd.s32 %s55, 1
      %p59 = scmp.eq.s32.totalorder %s21, 1
      %p60 = scmp.ne.s32.totalorder %s55, %s57
      %p61 = scmp.eq.s32.totalorder %s21, 0
      %p62 = por %p60, %p61
      %p63 = scmp.ne.s32.totalorder %s55, %s57
      %p64 = scmp.eq.s32.totalorder %s26, 1
      %p65 = por %p63, %p64
      %p66 = scmp.ne.s32.totalorder %s57, %s58
      %p67 = scmp.eq.s32.totalorder %s26, 0
      %p68 = por %p66, %p67
      %p69 = scmp.ne.s32.totalorder %s57, %s58
      %p70 = scmp.eq.s32.totalorder %s27, 1
      %p71 = por %p69, %p70
      %p73 = scmp.ne.s32.totalorder %s58, %s72
      %p74 = scmp.eq.s32.totalorder %s27, 0
      %p75 = por %p73, %p74
      %s77 = sadd.s32 %s76, 1
      %p80 = scmp.eq.s32.totalorder %s21, 1
      %p81 = scmp.ne.s32.totalorder %s76, %s78
      %p82 = scmp.eq.s32.totalorder %s21, 0
      %p83 = por %p81, %p82
      %p84 = scmp.ne.s32.totalorder %s76, %s78
      %p85 = scmp.eq.s32.totalorder %s26, 1
      %p86 = por %p84, %p85
      %p87 = scmp.ne.s32.totalorder %s78, %s79
      %p88 = scmp.eq.s32.totalorder %s26, 0
      %p89 = por %p87, %p88
      %p90 = scmp.ne.s32.totalorder %s78, %s79
      %p91 = scmp.eq.s32.totalorder %s27, 1
      %p92 = por %p90, %p91
      %p94 = scmp.ne.s32.totalorder %s79, %s93
      %p95 = scmp.eq.s32.totalorder %s27, 0
      %p96 = por %p94, %p95
      %s98 = sadd.s32 %s97, 1
      %p101 = scmp.eq.s32.totalorder %s21, 1
      %p102 = scmp.ne.s32.totalorder %s97, %s99
      %p103 = scmp.eq.s32.totalorder %s21, 0
      %p104 = por %p102, %p103
      %p105 = scmp.ne.s32.totalorder %s97, %s99
      %p106 = scmp.eq.s32.totalorder %s26, 1
      %p107 = por %p105, %p106
      %p108 = scmp.ne.s32.totalorder %s99, %s100
      %p109 = scmp.eq.s32.totalorder %s26, 0
      %p110 = por %p108, %p109
      %p111 = scmp.ne.s32.totalorder %s99, %s100
      %p112 = scmp.eq.s32.totalorder %s27, 1
      %p113 = por %p111, %p112
      %p115 = scmp.ne.s32.totalorder %s100, %s114
      %p116 = scmp.eq.s32.totalorder %s27, 0
      %p117 = por %p115, %p116
      %s119 = sadd.s32 %s118, 1
      %p122 = scmp.eq.s32.totalorder %s21, 1
      %p123 = scmp.ne.s32.totalorder %s118, %s120
      %p124 = scmp.eq.s32.totalorder %s21, 0
      %p125 = por %p123, %p124
      %p126 = scmp.ne.s32.totalorder %s118, %s120
      %p127 = scmp.eq.s32.totalorder %s26, 1
      %p128 = por %p126, %p127
      %p129 = scmp.ne.s32.totalorder %s120, %s121
      %p130 = scmp.eq.s32.totalorder %s26, 0
      %p131 = por %p129, %p130
      %p132 = scmp.ne.s32.totalorder %s120, %s121
      %p133 = scmp.eq.s32.totalorder %s27, 1
      %p134 = por %p132, %p133
      %p136 = scmp.ne.s32.totalorder %s121, %s135
      %p137 = scmp.eq.s32.totalorder %s27, 0
      %p138 = por %p136, %p137
      %s140 = sadd.s32 %s139, 1
      %p143 = scmp.eq.s32.totalorder %s21, 1
      %p144 = scmp.ne.s32.totalorder %s139, %s141
      %p145 = scmp.eq.s32.totalorder %s21, 0
      %p146 = por %p144, %p145
      %p147 = scmp.ne.s32.totalorder %s139, %s141
      %p148 = scmp.eq.s32.totalorder %s26, 1
      %p149 = por %p147, %p148
      %p150 = scmp.ne.s32.totalorder %s141, %s142
      %p151 = scmp.eq.s32.totalorder %s26, 0
      %p152 = por %p150, %p151
      %p153 = scmp.ne.s32.totalorder %s141, %s142
      %p154 = scmp.eq.s32.totalorder %s27, 1
      %p155 = por %p153, %p154
      %p157 = scmp.ne.s32.totalorder %s142, %s156
      %p158 = scmp.eq.s32.totalorder %s27, 0
      %p159 = por %p157, %p158
      %s161 = sadd.s32 %s160, 1
      %p164 = scmp.eq.s32.totalorder %s21, 1
      %p165 = scmp.ne.s32.totalorder %s160, %s162
      %p166 = scmp.eq.s32.totalorder %s21, 0
      %p167 = por %p165, %p166
      %p168 = scmp.ne.s32.totalorder %s160, %s162
      %p169 = scmp.eq.s32.totalorder %s26, 1
      %p170 = por %p168, %p169
      %p171 = scmp.ne.s32.totalorder %s162, %s163
      %p172 = scmp.eq.s32.totalorder %s26, 0
      %p173 = por %p171, %p172
      %p174 = scmp.ne.s32.totalorder %s162, %s163
      %p175 = scmp.eq.s32.totalorder %s27, 1
      %p176 = por %p174, %p175
      %p178 = scmp.ne.s32.totalorder %s163, %s177
      %p179 = scmp.eq.s32.totalorder %s27, 0
      %p180 = por %p178, %p179
      %s181 = ssub.s32 %s21, %s28
      %p182 = scmp.eq.s32.totalorder %s181, 0
      %s184 = sadd.s32 %s183, 1
      %s185 = scalar_select %p182, %s183, %s184
      %p188 = pneg %p182
      %p189 = scmp.eq.s32.totalorder %s21, 1
      %p190 = por %p188, %p189
      %p191 = scmp.ne.s32.totalorder %s183, %s186
      %p192 = scmp.eq.s32.totalorder %s21, 0
      %p193 = por %p191, %p192
      %p194 = scmp.ne.s32.totalorder %s183, %s186
      %p195 = scmp.eq.s32.totalorder %s26, 1
      %p196 = por %p194, %p195
      %p197 = scmp.ne.s32.totalorder %s186, %s187
      %p198 = scmp.eq.s32.totalorder %s26, 0
      %p199 = por %p197, %p198
      %p200 = scmp.ne.s32.totalorder %s186, %s187
      %p201 = scmp.eq.s32.totalorder %s27, 1
      %p202 = por %p200, %p201
      %p204 = scmp.ne.s32.totalorder %s187, %s203
      %p205 = scmp.eq.s32.totalorder %s27, 0
      %p206 = por %p204, %p205
      %p207 = scmp.le.s32.totalorder 1, %s21
      %p208 = scmp.lt.s32.totalorder %s21, 3
      %p209 = pnand %p207, %p208
      %p210 = pneg %p209
      // Predicated region
      $region9: #{tpu_custom_call.1} parent=5 // pred_check
        _
      $region10: #{tpu_custom_call.1} parent=5 // pred_check_branch
        %212 = sbr.rel (%p209) target = $region12
      $region11: #{tpu_custom_call.1} parent=5 // pred_region
        %s213 = ssub.s32 %s21, 1
        // Predicated region
        $region13: #{tpu_custom_call.1} parent=11 // pred_check
          %p214 = pneg %p68
        $region14: #{tpu_custom_call.1} parent=11 // pred_check_branch
          %216 = sbr.rel (%p214) target = $region16
        $region15: #{tpu_custom_call.1} parent=11 // pred_region
          %s218 = ssub.s32 3072, 3072
          %219 = vsyncadd [#allocation6], %s218
          %s220 = sshll.u32 [#allocation5], 4
          %s221 = int_to_ptr.vmem [resolvable:$true] %s220
          %226 = dma.hbm_to_vmem [thread:$0]  %s1, 3072, %s221, [#allocation6], 64, 64, 4
        $region16: #{tpu_custom_call.1} parent=11 // pred_fallthru
          _
        // Predicated region
        $region17: #{tpu_custom_call.1} parent=11 // pred_check
          %p227 = pneg %p89
        $region18: #{tpu_custom_call.1} parent=11 // pred_check_branch
          %229 = sbr.rel (%p227) target = $region20
        $region19: #{tpu_custom_call.1} parent=11 // pred_region
          _
        $region20: #{tpu_custom_call.1} parent=11 // pred_fallthru
          _
        // Predicated region
        $region21: #{tpu_custom_call.1} parent=11 // pred_check
          %p230 = pneg %p110
        $region22: #{tpu_custom_call.1} parent=11 // pred_check_branch
          %232 = sbr.rel (%p230) target = $region24
        $region23: #{tpu_custom_call.1} parent=11 // pred_region
          %s234 = ssub.s32 3072, 3072
          %235 = vsyncadd [#allocation6], %s234
          %s236 = sshll.u32 [#allocation7], 4
          %s237 = int_to_ptr.vmem [resolvable:$true] %s236
          %242 = dma.hbm_to_vmem [thread:$0]  %s3, 3072, %s237, [#allocation6], 64, 64, 4
        $region24: #{tpu_custom_call.1} parent=11 // pred_fallthru
          _
        // Predicated region
        $region25: #{tpu_custom_call.1} parent=11 // pred_check
          %p243 = pneg %p131
        $region26: #{tpu_custom_call.1} parent=11 // pred_check_branch
          %245 = sbr.rel (%p243) target = $region28
        $region27: #{tpu_custom_call.1} parent=11 // pred_region
          _
        $region28: #{tpu_custom_call.1} parent=11 // pred_fallthru
          _
        // Predicated region
        $region29: #{tpu_custom_call.1} parent=11 // pred_check
          %p246 = pneg %p152
        $region30: #{tpu_custom_call.1} parent=11 // pred_check_branch
          %248 = sbr.rel (%p246) target = $region32
        $region31: #{tpu_custom_call.1} parent=11 // pred_region
          %s250 = ssub.s32 1024, 1024
          %251 = vsyncadd [#allocation9], %s250
          %s252 = sshll.u32 [#allocation8], 4
          %s253 = int_to_ptr.vmem [resolvable:$true] %s252
          %258 = dma.hbm_to_vmem [thread:$0]  %s5, 1024, %s253, [#allocation9], 64, 64, 4
        $region32: #{tpu_custom_call.1} parent=11 // pred_fallthru
          _
        // Predicated region
        $region33: #{tpu_custom_call.1} parent=11 // pred_check
          %p259 = pneg %p173
        $region34: #{tpu_custom_call.1} parent=11 // pred_check_branch
          %261 = sbr.rel (%p259) target = $region36
        $region35: #{tpu_custom_call.1} parent=11 // pred_region
          _
        $region36: #{tpu_custom_call.1} parent=11 // pred_fallthru
          _
      $region12: #{tpu_custom_call.1} parent=5 // pred_fallthru
        _
      %p262 = scmp.lt.s32.totalorder %s21, 2
      // Predicated region
      $region37: #{tpu_custom_call.1} parent=5 // pred_check
        %p263 = pneg %p262
      $region38: #{tpu_custom_call.1} parent=5 // pred_check_branch
        %265 = sbr.rel (%p263) target = $region40
      $region39: #{tpu_custom_call.1} parent=5 // pred_region
        // Predicated region
        $region41: #{tpu_custom_call.1} parent=39 // pred_check
          %p266 = pneg %p41
        $region42: #{tpu_custom_call.1} parent=39 // pred_check_branch
          %268 = sbr.rel (%p266) target = $region44
        $region43: #{tpu_custom_call.1} parent=39 // pred_region
          %s269 = sand.u32 %s31, 1
          %s270 = scalar_lea.sflag [#allocation3], %s269
          %s271 = sand.u32 %s31, 1
          %s272 = smul.addr %s271, 8
          %s273 = scalar_lea.vmem [#allocation2], %s272
          %s275 = ssub.s32 128, 128
          %276 = vsyncadd %s270, %s275
          %s277 = smul.addr %s21, 2
          %s278 = smul.addr %s277, 64
          %s279 = scalar_lea.hbm %s0, %s278
          %s280 = sshll.u32 %s273, 4
          %s281 = int_to_ptr.vmem [resolvable:$true] %s280
          %286 = dma.hbm_to_vmem [thread:$0]  %s279, 128, %s281, %s270, 64, 64, 4
        $region44: #{tpu_custom_call.1} parent=39 // pred_fallthru
          _
      $region40: #{tpu_custom_call.1} parent=5 // pred_fallthru
        _
      %p287 = scmp.le.s32.totalorder 1, %s21
      %p288 = scmp.lt.s32.totalorder %s21, 3
      %p289 = pnand %p287, %p288
      %p290 = pneg %p289
      // Predicated region
      $region45: #{tpu_custom_call.1} parent=5 // pred_check
        _
      $region46: #{tpu_custom_call.1} parent=5 // pred_check_branch
        %292 = sbr.rel (%p289) target = $region48
      $region47: #{tpu_custom_call.1} parent=5 // pred_region
        %s293 = ssub.s32 %s21, 1
        %s294 = sand.u32 %s34, 1
        %s295 = scalar_lea.sflag [#allocation3], %s294
        %s296 = sand.u32 %s34, 1
        %s297 = smul.addr %s296, 8
        %s298 = scalar_lea.vmem [#allocation2], %s297
        // Predicated region
        $region49: #{tpu_custom_call.1} parent=47 // pred_check
          %p299 = pneg %p47
        $region50: #{tpu_custom_call.1} parent=47 // pred_check_branch
          %301 = sbr.rel (%p299) target = $region52
        $region51: #{tpu_custom_call.1} parent=47 // pred_region
          %302 = dma.done %s295, 128
        $region52: #{tpu_custom_call.1} parent=47 // pred_fallthru
          _
        // Predicated region
        $region53: #{tpu_custom_call.1} parent=47 // pred_check
          %p303 = pneg %p68
        $region54: #{tpu_custom_call.1} parent=47 // pred_check_branch
          %305 = sbr.rel (%p303) target = $region56
        $region55: #{tpu_custom_call.1} parent=47 // pred_region
          %306 = dma.done [#allocation6], 3072
        $region56: #{tpu_custom_call.1} parent=47 // pred_fallthru
          _
        // Predicated region
        $region57: #{tpu_custom_call.1} parent=47 // pred_check
          %p307 = pneg %p110
        $region58: #{tpu_custom_call.1} parent=47 // pred_check_branch
          %309 = sbr.rel (%p307) target = $region60
        $region59: #{tpu_custom_call.1} parent=47 // pred_region
          %310 = dma.done [#allocation6], 3072
        $region60: #{tpu_custom_call.1} parent=47 // pred_fallthru
          _
        // Predicated region
        $region61: #{tpu_custom_call.1} parent=47 // pred_check
          %p311 = pneg %p152
        $region62: #{tpu_custom_call.1} parent=47 // pred_check_branch
          %313 = sbr.rel (%p311) target = $region64
        $region63: #{tpu_custom_call.1} parent=47 // pred_region
          %314 = dma.done [#allocation9], 1024
        $region64: #{tpu_custom_call.1} parent=47 // pred_fallthru
          _
        %s315 = sand.u32 %s34, 1
        %s316 = scalar_lea.sflag [#allocation3], %s315
        %s317 = sand.u32 %s34, 1
        %s318 = smul.addr %s317, 8
        %s319 = scalar_lea.vmem [#allocation2], %s318
        %p320 = pneg %p47
        %p321 = pneg %p44
        %p322 = pneg %p68
        %p323 = pneg %p65
        %p324 = pneg %p89
        %p325 = pneg %p86
        %p326 = pneg %p110
        %p327 = pneg %p107
        %p328 = pneg %p131
        %p329 = pneg %p128
        %p330 = pneg %p152
        %p331 = pneg %p149
        %p332 = pneg %p173
        %p333 = pneg %p170
        %p334 = pneg %p199
        %p335 = pneg %p196
        %s336 = sand.u32 %s186, 1
        %s337 = scalar_lea.sflag [#allocation4], %s336
        %s338 = sand.u32 %s186, 1
        %s339 = smul.addr %s338, 8
        %s340 = scalar_lea.vmem [#allocation10], %s339
        %v342 = vld [vmem:[%s298] sm:$0xf]
        %v343 = vld [vmem:[%s298 + $0x4] sm:$0xf]
        %v344 = vunpack.c.l.bf16 %v342
        %v345 = vunpack.c.l.bf16 %v343
        %v346 = vlaneseq
        %v347 = vshrl.u32 %v346, 7
        %v348 = vadd.s32 %v347, 8
        %v349 = vrot.slane %v344, 6
        %v350 = vrot.slane %v345, 6
        %vm351 = vcmp.lt.s32.totalorder %v347, 2
        %v352 = vsel %vm351, %v349, %v350
        %v353 = vsel %vm351, %v350, %v349
        %vm354 = vcmp.ge.s32.totalorder %v347, 2
        %vm355 = vcmp.ge.s32.totalorder %v348, 2
        %v356 = vsel %vm354, %v353, 0.0
        %v357 = vsel %vm355, %v352, 0.0
        %v358 = vrot.slane %v344, 7
        %v359 = vrot.slane %v345, 7
        %vm360 = vcmp.lt.s32.totalorder %v347, 1
        %v361 = vsel %vm360, %v358, %v359
        %v362 = vsel %vm360, %v359, %v358
        %vm363 = vcmp.ge.s32.totalorder %v347, 1
        %vm364 = vcmp.ge.s32.totalorder %v348, 1
        %v365 = vsel %vm363, %v362, 0.0
        %v366 = vsel %vm364, %v361, 0.0
        %v367 = vpack.c.bf16 %v357, %v356
        %v368 = vpack.c.bf16 %v366, %v365
        %v369 = vpack.c.bf16 %v345, %v344
        %v370 = vld [vmem:[#allocation5] sm:$0xf]
        %v371 = vld [vmem:[#allocation5 + $0x4] sm:$0xf]
        %v372 = vld [vmem:[#allocation5 + $0x8] sm:$0xf]
        %v373 = vld [vmem:[#allocation5 + $0xc] sm:$0xf]
        %v374 = vld [vmem:[#allocation5 + $0x10] sm:$0xf]
        %v375 = vld [vmem:[#allocation5 + $0x14] sm:$0xf]
        %v376 = vld [vmem:[#allocation5 + $0x18] sm:$0xf]
        %v377 = vld [vmem:[#allocation5 + $0x1c] sm:$0xf]
        %v378 = vld [vmem:[#allocation5 + $0x20] sm:$0xf]
        %v379 = vld [vmem:[#allocation5 + $0x24] sm:$0xf]
        %v380 = vld [vmem:[#allocation5 + $0x28] sm:$0xf]
        %v381 = vld [vmem:[#allocation5 + $0x2c] sm:$0xf]
        %v382 = vld [vmem:[#allocation5 + $0x30] sm:$0xf]
        %v383 = vld [vmem:[#allocation5 + $0x34] sm:$0xf]
        %v384 = vld [vmem:[#allocation5 + $0x38] sm:$0xf]
        %v385 = vld [vmem:[#allocation5 + $0x3c] sm:$0xf]
        %v386 = vld [vmem:[#allocation5 + $0x40] sm:$0xf]
        %v387 = vld [vmem:[#allocation5 + $0x44] sm:$0xf]
        %v388 = vld [vmem:[#allocation5 + $0x48] sm:$0xf]
        %v389 = vld [vmem:[#allocation5 + $0x4c] sm:$0xf]
        %v390 = vld [vmem:[#allocation5 + $0x50] sm:$0xf]
        %v391 = vld [vmem:[#allocation5 + $0x54] sm:$0xf]
        %v392 = vld [vmem:[#allocation5 + $0x58] sm:$0xf]
        %v393 = vld [vmem:[#allocation5 + $0x5c] sm:$0xf]
        %v394 = vld [vmem:[#allocation5 + $0x60] sm:$0xf]
        %v395 = vld [vmem:[#allocation5 + $0x64] sm:$0xf]
        %v396 = vld [vmem:[#allocation5 + $0x68] sm:$0xf]
        %v397 = vld [vmem:[#allocation5 + $0x6c] sm:$0xf]
        %v398 = vld [vmem:[#allocation5 + $0x70] sm:$0xf]
        %v399 = vld [vmem:[#allocation5 + $0x74] sm:$0xf]
        %v400 = vld [vmem:[#allocation5 + $0x78] sm:$0xf]
        %v401 = vld [vmem:[#allocation5 + $0x7c] sm:$0xf]
        %v402 = vld [vmem:[#allocation5 + $0x80] sm:$0xf]
        %v403 = vld [vmem:[#allocation5 + $0x84] sm:$0xf]
        %v404 = vld [vmem:[#allocation5 + $0x88] sm:$0xf]
        %v405 = vld [vmem:[#allocation5 + $0x8c] sm:$0xf]
        %v406 = vld [vmem:[#allocation5 + $0x90] sm:$0xf]
        %v407 = vld [vmem:[#allocation5 + $0x94] sm:$0xf]
        %v408 = vld [vmem:[#allocation5 + $0x98] sm:$0xf]
        %v409 = vld [vmem:[#allocation5 + $0x9c] sm:$0xf]
        %v410 = vld [vmem:[#allocation5 + $0xa0] sm:$0xf]
        %v411 = vld [vmem:[#allocation5 + $0xa4] sm:$0xf]
        %v412 = vld [vmem:[#allocation5 + $0xa8] sm:$0xf]
        %v413 = vld [vmem:[#allocation5 + $0xac] sm:$0xf]
        %v414 = vld [vmem:[#allocation5 + $0xb0] sm:$0xf]
        %v415 = vld [vmem:[#allocation5 + $0xb4] sm:$0xf]
        %v416 = vld [vmem:[#allocation5 + $0xb8] sm:$0xf]
        %v417 = vld [vmem:[#allocation5 + $0xbc] sm:$0xf]
        %v418 = vld [vmem:[%s2] sm:$0x1]
        %v420 = vlaneseq
        %v421 = vshrl.u32 %v420, 7
        %v422 = vsub.s32 0, %v421
        %v423 = vrot.slane %v418, %v422
        %v473 = vunpack.c.l.b16 %v370
        %v474 = vunpack.c.l.b16 %v371
        %v475 = vunpack.c.l.b16 %v372
        %v476 = vunpack.c.l.b16 %v373
        %v477 = vunpack.c.l.b16 %v374
        %v478 = vunpack.c.l.b16 %v375
        %v479 = vunpack.c.l.b16 %v376
        %v480 = vunpack.c.l.b16 %v377
        %v481 = vunpack.c.l.b16 %v378
        %v482 = vunpack.c.l.b16 %v379
        %v483 = vunpack.c.l.b16 %v380
        %v484 = vunpack.c.l.b16 %v381
        %v485 = vunpack.c.l.b16 %v382
        %v486 = vunpack.c.l.b16 %v383
        %v487 = vunpack.c.l.b16 %v384
        %v488 = vunpack.c.l.b16 %v385
        %v489 = vunpack.c.l.b16 %v386
        %v490 = vunpack.c.l.b16 %v387
        %v491 = vunpack.c.l.b16 %v388
        %v492 = vunpack.c.l.b16 %v389
        %v493 = vunpack.c.l.b16 %v390
        %v494 = vunpack.c.l.b16 %v391
        %v495 = vunpack.c.l.b16 %v392
        %v496 = vunpack.c.l.b16 %v393
        %v497 = vunpack.c.l.b16 %v394
        %v498 = vunpack.c.l.b16 %v395
        %v499 = vunpack.c.l.b16 %v396
        %v500 = vunpack.c.l.b16 %v397
        %v501 = vunpack.c.l.b16 %v398
        %v502 = vunpack.c.l.b16 %v399
        %v503 = vunpack.c.l.b16 %v400
        %v504 = vunpack.c.l.b16 %v401
        %v505 = vunpack.c.l.b16 %v402
        %v506 = vunpack.c.l.b16 %v403
        %v507 = vunpack.c.l.b16 %v404
        %v508 = vunpack.c.l.b16 %v405
        %v509 = vunpack.c.l.b16 %v406
        %v510 = vunpack.c.l.b16 %v407
        %v511 = vunpack.c.l.b16 %v408
        %v512 = vunpack.c.l.b16 %v409
        %v513 = vunpack.c.l.b16 %v410
        %v514 = vunpack.c.l.b16 %v411
        %v515 = vunpack.c.l.b16 %v412
        %v516 = vunpack.c.l.b16 %v413
        %v517 = vunpack.c.l.b16 %v414
        %v518 = vunpack.c.l.b16 %v415
        %v519 = vunpack.c.l.b16 %v416
        %v520 = vunpack.c.l.b16 %v417
        %v521 = vpack.c.b16 %v474, %v473
        %v522 = vpack.c.b16 %v476, %v475
        %v523 = vpack.c.b16 %v478, %v477
        %v524 = vpack.c.b16 %v480, %v479
        %v525 = vpack.c.b16 %v482, %v481
        %v526 = vpack.c.b16 %v484, %v483
        %v527 = vpack.c.b16 %v486, %v485
        %v528 = vpack.c.b16 %v488, %v487
        %v529 = vpack.c.b16 %v490, %v489
        %v530 = vpack.c.b16 %v492, %v491
        %v531 = vpack.c.b16 %v494, %v493
        %v532 = vpack.c.b16 %v496, %v495
        %v533 = vpack.c.b16 %v498, %v497
        %v534 = vpack.c.b16 %v500, %v499
        %v535 = vpack.c.b16 %v502, %v501
        %v536 = vpack.c.b16 %v504, %v503
        %v537 = vpack.c.b16 %v506, %v505
        %v538 = vpack.c.b16 %v508, %v507
        %v539 = vpack.c.b16 %v510, %v509
        %v540 = vpack.c.b16 %v512, %v511
        %v541 = vpack.c.b16 %v514, %v513
        %v542 = vpack.c.b16 %v516, %v515
        %v543 = vpack.c.b16 %v518, %v517
        %v544 = vpack.c.b16 %v520, %v519
        %569 = vmatprep.subr.bf16.mxu0 0
        %570 = vmatpush1.bf16.msra.mxu0 %v521
        %571 = vmatprep.subr.bf16.mxu0 0
        %572 = vmatpush1.bf16.msra.mxu0 %v522
        %573 = vmatprep.subr.bf16.mxu0 0
        %574 = vmatpush1.bf16.msra.mxu0 %v523
        %575 = vmatprep.subr.bf16.mxu0 0
        %576 = vmatpush1.bf16.msra.mxu0 %v524
        %577 = vmatprep.subr.bf16.mxu0 0
        %578 = vmatpush1.bf16.msra.mxu0 %v525
        %579 = vmatprep.subr.bf16.mxu0 0
        %580 = vmatpush1.bf16.msra.mxu0 %v526
        %581 = vmatprep.subr.bf16.mxu0 0
        %582 = vmatpush1.bf16.msra.mxu0 %v527
        %583 = vmatprep.subr.bf16.mxu0 0
        %584 = vmatpush1.bf16.msra.mxu0 %v528
        %585 = vmatprep.subr.bf16.mxu0 0
        %586 = vmatpush1.bf16.msra.mxu0 %v529
        %587 = vmatprep.subr.bf16.mxu0 0
        %588 = vmatpush1.bf16.msra.mxu0 %v530
        %589 = vmatprep.subr.bf16.mxu0 0
        %590 = vmatpush1.bf16.msra.mxu0 %v531
        %591 = vmatprep.subr.bf16.mxu0 0
        %592 = vmatpush1.bf16.msra.mxu0 %v532
        %593 = vmatprep.subr.bf16.mxu0 0
        %594 = vmatpush1.bf16.msra.mxu0 %v533
        %595 = vmatprep.subr.bf16.mxu0 0
        %596 = vmatpush1.bf16.msra.mxu0 %v534
        %597 = vmatprep.subr.bf16.mxu0 0
        %598 = vmatpush1.bf16.msra.mxu0 %v535
        %599 = vmatprep.subr.bf16.mxu0 0
        %600 = vmatpush1.bf16.msra.mxu0 %v536
        %601 = vmatprep.mubr.bf16.mxu0 %v368
        %602 = vmatmul.mubr.bf16.gmra.mrb[0].mxu0 %v367
        %v603 = vpop.f32.mrb[0].mxu0
        %v604 = vadd.f32 %v423, %v603
        %v605 = vpop.f32.mrb[0].mxu0
        %v606 = vpop.f32.mrb[0].mxu0
        %v607 = vadd.f32 %v423, %v606
        %v608 = vpop.f32.mrb[0].mxu0
        %609 = vdwg.mxu0
        %610 = vmatprep.subr.bf16.mxu0 0
        %611 = vmatpush1.bf16.msra.mxu0 %v537
        %612 = vmatprep.subr.bf16.mxu0 0
        %613 = vmatpush1.bf16.msra.mxu0 %v538
        %614 = vmatprep.subr.bf16.mxu0 0
        %615 = vmatpush1.bf16.msra.mxu0 %v539
        %616 = vmatprep.subr.bf16.mxu0 0
        %617 = vmatpush1.bf16.msra.mxu0 %v540
        %618 = vmatprep.subr.bf16.mxu0 0
        %619 = vmatpush1.bf16.msra.mxu0 %v541
        %620 = vmatprep.subr.bf16.mxu0 0
        %621 = vmatpush1.bf16.msra.mxu0 %v542
        %622 = vmatprep.subr.bf16.mxu0 0
        %623 = vmatpush1.bf16.msra.mxu0 %v543
        %624 = vmatprep.subr.bf16.mxu0 0
        %625 = vmatpush1.bf16.msra.mxu0 %v544
        %626 = vmatprep.subr.bf16.mxu0 0
        %627 = vmatpush1.bf16.msra.mxu0 0
        %628 = vmatprep.subr.bf16.mxu0 0
        %629 = vmatpush1.bf16.msra.mxu0 0
        %630 = vmatprep.subr.bf16.mxu0 0
        %631 = vmatpush1.bf16.msra.mxu0 0
        %632 = vmatprep.subr.bf16.mxu0 0
        %633 = vmatpush1.bf16.msra.mxu0 0
        %634 = vmatprep.subr.bf16.mxu0 0
        %635 = vmatpush1.bf16.msra.mxu0 0
        %636 = vmatprep.subr.bf16.mxu0 0
        %637 = vmatpush1.bf16.msra.mxu0 0
        %638 = vmatprep.subr.bf16.mxu0 0
        %639 = vmatpush1.bf16.msra.mxu0 0
        %640 = vmatprep.subr.bf16.mxu0 0
        %641 = vmatpush1.bf16.msra.mxu0 0
        %642 = vmatprep.mubr.bf16.mxu0 0
        %643 = vmatmul.mubr.bf16.gmra.mrb[0].mxu0 %v369
        %v644 = vpop.f32.mrb[0].mxu0
        %v645 = vadd.f32 %v604, %v644
        %v646 = vpop.f32.mrb[0].mxu0
        %v647 = vpop.f32.mrb[0].mxu0
        %v648 = vadd.f32 %v607, %v647
        %v649 = vpop.f32.mrb[0].mxu0
        %650 = vdwg.mxu0
        %v651 = vmax.f32 %v645, 0.0
        %v652 = vmax.f32 %v648, 0.0
        %v653 = vrot.slane %v651, 6
        %v654 = vrot.slane %v652, 6
        %v655 = vsel %vm351, %v653, %v654
        %v656 = vsel %vm351, %v654, %v653
        %v657 = vsel %vm354, %v656, 0.0
        %v658 = vsel %vm355, %v655, 0.0
        %v659 = vrot.slane %v651, 7
        %v660 = vrot.slane %v652, 7
        %v661 = vsel %vm360, %v659, %v660
        %v662 = vsel %vm360, %v660, %v659
        %v663 = vsel %vm363, %v662, 0.0
        %v664 = vsel %vm364, %v661, 0.0
        %v665 = vpack.c.bf16 %v658, %v657
        %v666 = vpack.c.bf16 %v664, %v663
        %v667 = vpack.c.bf16 %v652, %v651
        %v668 = vld [vmem:[#allocation7] sm:$0xf]
        %v669 = vld [vmem:[#allocation7 + $0x4] sm:$0xf]
        %v670 = vld [vmem:[#allocation7 + $0x8] sm:$0xf]
        %v671 = vld [vmem:[#allocation7 + $0xc] sm:$0xf]
        %v672 = vld [vmem:[#allocation7 + $0x10] sm:$0xf]
        %v673 = vld [vmem:[#allocation7 + $0x14] sm:$0xf]
        %v674 = vld [vmem:[#allocation7 + $0x18] sm:$0xf]
        %v675 = vld [vmem:[#allocation7 + $0x1c] sm:$0xf]
        %v676 = vld [vmem:[#allocation7 + $0x20] sm:$0xf]
        %v677 = vld [vmem:[#allocation7 + $0x24] sm:$0xf]
        %v678 = vld [vmem:[#allocation7 + $0x28] sm:$0xf]
        %v679 = vld [vmem:[#allocation7 + $0x2c] sm:$0xf]
        %v680 = vld [vmem:[#allocation7 + $0x30] sm:$0xf]
        %v681 = vld [vmem:[#allocation7 + $0x34] sm:$0xf]
        %v682 = vld [vmem:[#allocation7 + $0x38] sm:$0xf]
        %v683 = vld [vmem:[#allocation7 + $0x3c] sm:$0xf]
        %v684 = vld [vmem:[#allocation7 + $0x40] sm:$0xf]
        %v685 = vld [vmem:[#allocation7 + $0x44] sm:$0xf]
        %v686 = vld [vmem:[#allocation7 + $0x48] sm:$0xf]
        %v687 = vld [vmem:[#allocation7 + $0x4c] sm:$0xf]
        %v688 = vld [vmem:[#allocation7 + $0x50] sm:$0xf]
        %v689 = vld [vmem:[#allocation7 + $0x54] sm:$0xf]
        %v690 = vld [vmem:[#allocation7 + $0x58] sm:$0xf]
        %v691 = vld [vmem:[#allocation7 + $0x5c] sm:$0xf]
        %v692 = vld [vmem:[#allocation7 + $0x60] sm:$0xf]
        %v693 = vld [vmem:[#allocation7 + $0x64] sm:$0xf]
        %v694 = vld [vmem:[#allocation7 + $0x68] sm:$0xf]
        %v695 = vld [vmem:[#allocation7 + $0x6c] sm:$0xf]
        %v696 = vld [vmem:[#allocation7 + $0x70] sm:$0xf]
        %v697 = vld [vmem:[#allocation7 + $0x74] sm:$0xf]
        %v698 = vld [vmem:[#allocation7 + $0x78] sm:$0xf]
        %v699 = vld [vmem:[#allocation7 + $0x7c] sm:$0xf]
        %v700 = vld [vmem:[#allocation7 + $0x80] sm:$0xf]
        %v701 = vld [vmem:[#allocation7 + $0x84] sm:$0xf]
        %v702 = vld [vmem:[#allocation7 + $0x88] sm:$0xf]
        %v703 = vld [vmem:[#allocation7 + $0x8c] sm:$0xf]
        %v704 = vld [vmem:[#allocation7 + $0x90] sm:$0xf]
        %v705 = vld [vmem:[#allocation7 + $0x94] sm:$0xf]
        %v706 = vld [vmem:[#allocation7 + $0x98] sm:$0xf]
        %v707 = vld [vmem:[#allocation7 + $0x9c] sm:$0xf]
        %v708 = vld [vmem:[#allocation7 + $0xa0] sm:$0xf]
        %v709 = vld [vmem:[#allocation7 + $0xa4] sm:$0xf]
        %v710 = vld [vmem:[#allocation7 + $0xa8] sm:$0xf]
        %v711 = vld [vmem:[#allocation7 + $0xac] sm:$0xf]
        %v712 = vld [vmem:[#allocation7 + $0xb0] sm:$0xf]
        %v713 = vld [vmem:[#allocation7 + $0xb4] sm:$0xf]
        %v714 = vld [vmem:[#allocation7 + $0xb8] sm:$0xf]
        %v715 = vld [vmem:[#allocation7 + $0xbc] sm:$0xf]
        %v716 = vld [vmem:[%s4] sm:$0x1]
        %v718 = vlaneseq
        %v719 = vshrl.u32 %v718, 7
        %v720 = vsub.s32 0, %v719
        %v721 = vrot.slane %v716, %v720
        %v771 = vunpack.c.l.b16 %v668
        %v772 = vunpack.c.l.b16 %v669
        %v773 = vunpack.c.l.b16 %v670
        %v774 = vunpack.c.l.b16 %v671
        %v775 = vunpack.c.l.b16 %v672
        %v776 = vunpack.c.l.b16 %v673
        %v777 = vunpack.c.l.b16 %v674
        %v778 = vunpack.c.l.b16 %v675
        %v779 = vunpack.c.l.b16 %v676
        %v780 = vunpack.c.l.b16 %v677
        %v781 = vunpack.c.l.b16 %v678
        %v782 = vunpack.c.l.b16 %v679
        %v783 = vunpack.c.l.b16 %v680
        %v784 = vunpack.c.l.b16 %v681
        %v785 = vunpack.c.l.b16 %v682
        %v786 = vunpack.c.l.b16 %v683
        %v787 = vunpack.c.l.b16 %v684
        %v788 = vunpack.c.l.b16 %v685
        %v789 = vunpack.c.l.b16 %v686
        %v790 = vunpack.c.l.b16 %v687
        %v791 = vunpack.c.l.b16 %v688
        %v792 = vunpack.c.l.b16 %v689
        %v793 = vunpack.c.l.b16 %v690
        %v794 = vunpack.c.l.b16 %v691
        %v795 = vunpack.c.l.b16 %v692
        %v796 = vunpack.c.l.b16 %v693
        %v797 = vunpack.c.l.b16 %v694
        %v798 = vunpack.c.l.b16 %v695
        %v799 = vunpack.c.l.b16 %v696
        %v800 = vunpack.c.l.b16 %v697
        %v801 = vunpack.c.l.b16 %v698
        %v802 = vunpack.c.l.b16 %v699
        %v803 = vunpack.c.l.b16 %v700
        %v804 = vunpack.c.l.b16 %v701
        %v805 = vunpack.c.l.b16 %v702
        %v806 = vunpack.c.l.b16 %v703
        %v807 = vunpack.c.l.b16 %v704
        %v808 = vunpack.c.l.b16 %v705
        %v809 = vunpack.c.l.b16 %v706
        %v810 = vunpack.c.l.b16 %v707
        %v811 = vunpack.c.l.b16 %v708
        %v812 = vunpack.c.l.b16 %v709
        %v813 = vunpack.c.l.b16 %v710
        %v814 = vunpack.c.l.b16 %v711
        %v815 = vunpack.c.l.b16 %v712
        %v816 = vunpack.c.l.b16 %v713
        %v817 = vunpack.c.l.b16 %v714
        %v818 = vunpack.c.l.b16 %v715
        %v819 = vpack.c.b16 %v772, %v771
        %v820 = vpack.c.b16 %v774, %v773
        %v821 = vpack.c.b16 %v776, %v775
        %v822 = vpack.c.b16 %v778, %v777
        %v823 = vpack.c.b16 %v780, %v779
        %v824 = vpack.c.b16 %v782, %v781
        %v825 = vpack.c.b16 %v784, %v783
        %v826 = vpack.c.b16 %v786, %v785
        %v827 = vpack.c.b16 %v788, %v787
        %v828 = vpack.c.b16 %v790, %v789
        %v829 = vpack.c.b16 %v792, %v791
        %v830 = vpack.c.b16 %v794, %v793
        %v831 = vpack.c.b16 %v796, %v795
        %v832 = vpack.c.b16 %v798, %v797
        %v833 = vpack.c.b16 %v800, %v799
        %v834 = vpack.c.b16 %v802, %v801
        %v835 = vpack.c.b16 %v804, %v803
        %v836 = vpack.c.b16 %v806, %v805
        %v837 = vpack.c.b16 %v808, %v807
        %v838 = vpack.c.b16 %v810, %v809
        %v839 = vpack.c.b16 %v812, %v811
        %v840 = vpack.c.b16 %v814, %v813
        %v841 = vpack.c.b16 %v816, %v815
        %v842 = vpack.c.b16 %v818, %v817
        %867 = vmatprep.subr.bf16.mxu0 0
        %868 = vmatpush1.bf16.msra.mxu0 %v819
        %869 = vmatprep.subr.bf16.mxu0 0
        %870 = vmatpush1.bf16.msra.mxu0 %v820
        %871 = vmatprep.subr.bf16.mxu0 0
        %872 = vmatpush1.bf16.msra.mxu0 %v821
        %873 = vmatprep.subr.bf16.mxu0 0
        %874 = vmatpush1.bf16.msra.mxu0 %v822
        %875 = vmatprep.subr.bf16.mxu0 0
        %876 = vmatpush1.bf16.msra.mxu0 %v823
        %877 = vmatprep.subr.bf16.mxu0 0
        %878 = vmatpush1.bf16.msra.mxu0 %v824
        %879 = vmatprep.subr.bf16.mxu0 0
        %880 = vmatpush1.bf16.msra.mxu0 %v825
        %881 = vmatprep.subr.bf16.mxu0 0
        %882 = vmatpush1.bf16.msra.mxu0 %v826
        %883 = vmatprep.subr.bf16.mxu0 0
        %884 = vmatpush1.bf16.msra.mxu0 %v827
        %885 = vmatprep.subr.bf16.mxu0 0
        %886 = vmatpush1.bf16.msra.mxu0 %v828
        %887 = vmatprep.subr.bf16.mxu0 0
        %888 = vmatpush1.bf16.msra.mxu0 %v829
        %889 = vmatprep.subr.bf16.mxu0 0
        %890 = vmatpush1.bf16.msra.mxu0 %v830
        %891 = vmatprep.subr.bf16.mxu0 0
        %892 = vmatpush1.bf16.msra.mxu0 %v831
        %893 = vmatprep.subr.bf16.mxu0 0
        %894 = vmatpush1.bf16.msra.mxu0 %v832
        %895 = vmatprep.subr.bf16.mxu0 0
        %896 = vmatpush1.bf16.msra.mxu0 %v833
        %897 = vmatprep.subr.bf16.mxu0 0
        %898 = vmatpush1.bf16.msra.mxu0 %v834
        %899 = vmatprep.mubr.bf16.mxu0 %v666
        %900 = vmatmul.mubr.bf16.gmra.mrb[0].mxu0 %v665
        %v901 = vpop.f32.mrb[0].mxu0
        %v902 = vadd.f32 %v721, %v901
        %v903 = vpop.f32.mrb[0].mxu0
        %v904 = vpop.f32.mrb[0].mxu0
        %v905 = vadd.f32 %v721, %v904
        %v906 = vpop.f32.mrb[0].mxu0
        %907 = vdwg.mxu0
        %908 = vmatprep.subr.bf16.mxu0 0
        %909 = vmatpush1.bf16.msra.mxu0 %v835
        %910 = vmatprep.subr.bf16.mxu0 0
        %911 = vmatpush1.bf16.msra.mxu0 %v836
        %912 = vmatprep.subr.bf16.mxu0 0
        %913 = vmatpush1.bf16.msra.mxu0 %v837
        %914 = vmatprep.subr.bf16.mxu0 0
        %915 = vmatpush1.bf16.msra.mxu0 %v838
        %916 = vmatprep.subr.bf16.mxu0 0
        %917 = vmatpush1.bf16.msra.mxu0 %v839
        %918 = vmatprep.subr.bf16.mxu0 0
        %919 = vmatpush1.bf16.msra.mxu0 %v840
        %920 = vmatprep.subr.bf16.mxu0 0
        %921 = vmatpush1.bf16.msra.mxu0 %v841
        %922 = vmatprep.subr.bf16.mxu0 0
        %923 = vmatpush1.bf16.msra.mxu0 %v842
        %924 = vmatprep.subr.bf16.mxu0 0
        %925 = vmatpush1.bf16.msra.mxu0 0
        %926 = vmatprep.subr.bf16.mxu0 0
        %927 = vmatpush1.bf16.msra.mxu0 0
        %928 = vmatprep.subr.bf16.mxu0 0
        %929 = vmatpush1.bf16.msra.mxu0 0
        %930 = vmatprep.subr.bf16.mxu0 0
        %931 = vmatpush1.bf16.msra.mxu0 0
        %932 = vmatprep.subr.bf16.mxu0 0
        %933 = vmatpush1.bf16.msra.mxu0 0
        %934 = vmatprep.subr.bf16.mxu0 0
        %935 = vmatpush1.bf16.msra.mxu0 0
        %936 = vmatprep.subr.bf16.mxu0 0
        %937 = vmatpush1.bf16.msra.mxu0 0
        %938 = vmatprep.subr.bf16.mxu0 0
        %939 = vmatpush1.bf16.msra.mxu0 0
        %940 = vmatprep.mubr.bf16.mxu0 0
        %941 = vmatmul.mubr.bf16.gmra.mrb[0].mxu0 %v667
        %v942 = vpop.f32.mrb[0].mxu0
        %v943 = vadd.f32 %v902, %v942
        %v944 = vpop.f32.mrb[0].mxu0
        %v945 = vpop.f32.mrb[0].mxu0
        %v946 = vadd.f32 %v905, %v945
        %v947 = vpop.f32.mrb[0].mxu0
        %948 = vdwg.mxu0
        %v949 = vmax.f32 %v943, 0.0
        %v950 = vmax.f32 %v946, 0.0
        %v951 = vld [vmem:[#allocation8] sm:$0xf]
        %v952 = vld [vmem:[#allocation8 + $0x4] sm:$0xf]
        %v953 = vld [vmem:[#allocation8 + $0x8] sm:$0xf]
        %v954 = vld [vmem:[#allocation8 + $0xc] sm:$0xf]
        %v955 = vld [vmem:[#allocation8 + $0x10] sm:$0xf]
        %v956 = vld [vmem:[#allocation8 + $0x14] sm:$0xf]
        %v957 = vld [vmem:[#allocation8 + $0x18] sm:$0xf]
        %v958 = vld [vmem:[#allocation8 + $0x1c] sm:$0xf]
        %v959 = vld [vmem:[#allocation8 + $0x20] sm:$0xf]
        %v960 = vld [vmem:[#allocation8 + $0x24] sm:$0xf]
        %v961 = vld [vmem:[#allocation8 + $0x28] sm:$0xf]
        %v962 = vld [vmem:[#allocation8 + $0x2c] sm:$0xf]
        %v963 = vld [vmem:[#allocation8 + $0x30] sm:$0xf]
        %v964 = vld [vmem:[#allocation8 + $0x34] sm:$0xf]
        %v965 = vld [vmem:[#allocation8 + $0x38] sm:$0xf]
        %v966 = vld [vmem:[#allocation8 + $0x3c] sm:$0xf]
        %v967 = vld [vmem:[%s6] sm:$0x1]
        %v969 = vlaneseq
        %v970 = vshrl.u32 %v969, 7
        %v971 = vsub.s32 0, %v970
        %v972 = vrot.slane %v967, %v971
        %v976 = vunpack.c.l.b16 %v342
        %v977 = vunpack.c.l.b16 %v343
        %v978 = vpack.c.b16 %v977, %v976
        %v996 = vunpack.c.l.b16 %v951
        %v997 = vunpack.c.l.b16 %v952
        %v998 = vunpack.c.l.b16 %v953
        %v999 = vunpack.c.l.b16 %v954
        %v1000 = vunpack.c.l.b16 %v955
        %v1001 = vunpack.c.l.b16 %v956
        %v1002 = vunpack.c.l.b16 %v957
        %v1003 = vunpack.c.l.b16 %v958
        %v1004 = vunpack.c.l.b16 %v959
        %v1005 = vunpack.c.l.b16 %v960
        %v1006 = vunpack.c.l.b16 %v961
        %v1007 = vunpack.c.l.b16 %v962
        %v1008 = vunpack.c.l.b16 %v963
        %v1009 = vunpack.c.l.b16 %v964
        %v1010 = vunpack.c.l.b16 %v965
        %v1011 = vunpack.c.l.b16 %v966
        %v1012 = vpack.c.b16 %v997, %v996
        %v1013 = vpack.c.b16 %v999, %v998
        %v1014 = vpack.c.b16 %v1001, %v1000
        %v1015 = vpack.c.b16 %v1003, %v1002
        %v1016 = vpack.c.b16 %v1005, %v1004
        %v1017 = vpack.c.b16 %v1007, %v1006
        %v1018 = vpack.c.b16 %v1009, %v1008
        %v1019 = vpack.c.b16 %v1011, %v1010
        %1028 = vmatprep.subr.bf16.mxu0 0
        %1029 = vmatpush1.bf16.msra.mxu0 %v1012
        %1030 = vmatprep.subr.bf16.mxu0 0
        %1031 = vmatpush1.bf16.msra.mxu0 %v1013
        %1032 = vmatprep.subr.bf16.mxu0 0
        %1033 = vmatpush1.bf16.msra.mxu0 %v1014
        %1034 = vmatprep.subr.bf16.mxu0 0
        %1035 = vmatpush1.bf16.msra.mxu0 %v1015
        %1036 = vmatprep.subr.bf16.mxu0 0
        %1037 = vmatpush1.bf16.msra.mxu0 %v1016
        %1038 = vmatprep.subr.bf16.mxu0 0
        %1039 = vmatpush1.bf16.msra.mxu0 %v1017
        %1040 = vmatprep.subr.bf16.mxu0 0
        %1041 = vmatpush1.bf16.msra.mxu0 %v1018
        %1042 = vmatprep.subr.bf16.mxu0 0
        %1043 = vmatpush1.bf16.msra.mxu0 %v1019
        %1044 = vmatprep.subr.bf16.mxu0 0
        %1045 = vmatpush1.bf16.msra.mxu0 0
        %1046 = vmatprep.subr.bf16.mxu0 0
        %1047 = vmatpush1.bf16.msra.mxu0 0
        %1048 = vmatprep.subr.bf16.mxu0 0
        %1049 = vmatpush1.bf16.msra.mxu0 0
        %1050 = vmatprep.subr.bf16.mxu0 0
        %1051 = vmatpush1.bf16.msra.mxu0 0
        %1052 = vmatprep.subr.bf16.mxu0 0
        %1053 = vmatpush1.bf16.msra.mxu0 0
        %1054 = vmatprep.subr.bf16.mxu0 0
        %1055 = vmatpush1.bf16.msra.mxu0 0
        %1056 = vmatprep.subr.bf16.mxu0 0
        %1057 = vmatpush1.bf16.msra.mxu0 0
        %1058 = vmatprep.subr.bf16.mxu0 0
        %1059 = vmatpush1.bf16.msra.mxu0 0
        %1060 = vmatprep.mubr.bf16.mxu0 0
        %1061 = vmatmul.mubr.bf16.gmra.mrb[0].mxu0 %v978
        %v1062 = vpop.f32.mrb[0].mxu0
        %v1063 = vadd.f32 %v972, %v1062
        %v1064 = vpop.f32.mrb[0].mxu0
        %v1065 = vpop.f32.mrb[0].mxu0
        %v1066 = vadd.f32 %v972, %v1065
        %v1067 = vpop.f32.mrb[0].mxu0
        %1068 = vdwg.mxu0
        %v1069 = vadd.f32 %v949, %v1063
        %v1070 = vadd.f32 %v950, %v1066
        %v1071 = vmax.f32 %v1069, 0.0
        %v1072 = vmax.f32 %v1070, 0.0
        %v1073 = vpack.c.bf16 %v1072, %v1071
        %v1075 = vunpack.c.l.b16 %v1073
        %v1076 = vunpack.c.h.b16 %v1073
        %v1077 = vpack.c.b16 %v1075, %v1075
        %v1078 = vpack.c.b16 %v1076, %v1076
        %1081 = vst [vmem:[%s340] sm:$0xf] %v1077
        %1082 = vst [vmem:[%s340 + $0x4] sm:$0xf] %v1078
        %s1083 = sand.u32 %s186, 1
        %s1084 = scalar_lea.sflag [#allocation4], %s1083
        %s1085 = sand.u32 %s186, 1
        %s1086 = smul.addr %s1085, 8
        %s1087 = scalar_lea.vmem [#allocation10], %s1086
        // Predicated region
        $region65: #{tpu_custom_call.1} parent=47 // pred_check
          %p1088 = pneg %p196
        $region66: #{tpu_custom_call.1} parent=47 // pred_check_branch
          %1090 = sbr.rel (%p1088) target = $region68
        $region67: #{tpu_custom_call.1} parent=47 // pred_region
          %s1092 = ssub.s32 128, 128
          %1093 = vsyncadd %s1084, %s1092
          %s1094 = smul.addr %s26, 2
          %s1095 = smul.addr %s1094, 64
          %s1096 = scalar_lea.hbm %s7, %s1095
          %s1097 = sshll.u32 %s1087, 4
          %s1098 = int_to_ptr.vmem [resolvable:$true] %s1097
          %1103 = dma.vmem_to_hbm [thread:$0]  %s1098, 128, %s1096, %s1084, 64, 64, 4
        $region68: #{tpu_custom_call.1} parent=47 // pred_fallthru
          _
      $region48: #{tpu_custom_call.1} parent=5 // pred_fallthru
        _
      %p1104 = scmp.le.s32.totalorder 2, %s21
      // Predicated region
      $region69: #{tpu_custom_call.1} parent=5 // pred_check
        %p1105 = pneg %p1104
      $region70: #{tpu_custom_call.1} parent=5 // pred_check_branch
        %1107 = sbr.rel (%p1105) target = $region72
      $region71: #{tpu_custom_call.1} parent=5 // pred_region
        %s1108 = ssub.s32 %s21, 2
        // Predicated region
        $region73: #{tpu_custom_call.1} parent=71 // pred_check
          %p1109 = pneg %p202
        $region74: #{tpu_custom_call.1} parent=71 // pred_check_branch
          %1111 = sbr.rel (%p1109) target = $region76
        $region75: #{tpu_custom_call.1} parent=71 // pred_region
          %s1112 = sand.u32 %s187, 1
          %s1113 = scalar_lea.sflag [#allocation4], %s1112
          %s1114 = sand.u32 %s187, 1
          %s1115 = smul.addr %s1114, 8
          %s1116 = scalar_lea.vmem [#allocation10], %s1115
          %1117 = dma.done %s1113, 128
        $region76: #{tpu_custom_call.1} parent=71 // pred_fallthru
          _
      $region72: #{tpu_custom_call.1} parent=5 // pred_fallthru
        _
    $region6: #{tpu_custom_call.1} parent=1 // loop_footer
      %s25 = sadd.s32 1, %s21
    $region7: #{tpu_custom_call.1} parent=1 // loop_footer_branch
      %20 = sbr.rel target = $region3
    $region8: #{tpu_custom_call.1} parent=1 // loop_exit
      _
    %1118 = vsyncpa [#allocation3], 1
    %s1119 = scalar_lea.sflag [#allocation3], 1
    %1120 = vsyncpa %s1119, 1
    %1121 = vsyncpa [#allocation6], 1
    %1122 = vsyncpa [#allocation9], 1
    %1123 = vsyncpa [#allocation4], 1
    %s1124 = scalar_lea.sflag [#allocation4], 1
    %1125 = vsyncpa %s1124, 1

</llo_original>
